<compile_context>
chip_gen: v6e
topology: v6e:2x2x1
jax: 0.10.0
libtpu: 0.0.40
codegen_flags: <defaults>
</compile_context>

<pallas_src>
import jax
import jax.numpy as jnp
from jax.experimental import pallas as pl
from jax.experimental.pallas import tpu as pltpu


# Contract the last (H) dim of both operands: q (bt,H) x eo_b (T,H) -> (bt,T).
_NT_DIMS = (((1,), (1,)), ((), ()))


def _make_attention_kernel(bt, T, use_mask):
    """Build a kernel specialized (at trace time) on tile size / masking."""

    def kernel(*refs):
        if use_mask:
            q_ref, eo_ref, len_ref, out_ref = refs
        else:
            q_ref, eo_ref, out_ref = refs
            len_ref = None

        q = q_ref[...]                                        # (bt, H)

        # scores[b, t] = eo[b, t, :] . q[b, :]
        # Done as bt small NT matmuls on the MXU (idle otherwise) with f32
        # accumulation, instead of a VPU multiply + cross-lane XLU reduction
        # over H (the lane axis), which would be the binding slot in this
        # memory-bound kernel.  bt is a small static constant -> unrolled.
        row = jax.lax.broadcasted_iota(jnp.int32, (bt, T), 0)
        scores = jnp.zeros((bt, T), jnp.float32)
        for b in range(bt):
            s_b = jax.lax.dot_general(q, eo_ref[b], _NT_DIMS,
                                      preferred_element_type=jnp.float32)  # (bt, T)
            scores = jnp.where(row == b, s_b, scores)          # keep row b

        if use_mask:
            t_idx = jax.lax.broadcasted_iota(jnp.int32, scores.shape, 1)
            scores = jnp.where(t_idx < len_ref[...], scores, -jnp.inf)

        # Numerically stable softmax over T (lane-dense output).  The finite
        # floor on the max and the guarded reciprocal make fully-masked rows
        # (seq_len == 0) produce zeros instead of NaN.
        m = jnp.maximum(jnp.max(scores, axis=-1, keepdims=True), -1e30)
        p = jnp.exp(scores - m)
        denom = jnp.sum(p, axis=-1, keepdims=True)
        inv = pl.reciprocal(jnp.maximum(denom, 1e-30), approx=False)  # EUP slot
        out_ref[...] = (p * inv).astype(out_ref.dtype)

    return kernel


def _choose_batch_tile(B, T, H, eo_itemsize, requested):
    """Pick bt: multiple of 8 dividing B (or bt == B), fitting a VMEM budget,
    preferring >= 4 grid steps so the eo DMA pipelines and v7x megacore is used."""
    def ws_bytes(bt):  # double-buffered per-step working set
        return 2 * (bt * T * H * eo_itemsize     # encoder_outputs tile
                    + bt * T * 4                 # output tile (f32)
                    + bt * H * eo_itemsize       # query tile
                    + bt * 4)                    # lengths

    if requested is not None:
        bt = int(requested)
        if not (bt == B or (bt % 8 == 0 and B % bt == 0)):
            raise ValueError(
                f"batch_tile={bt} must be a multiple of 8 dividing B={B} "
                "(or equal to B)")
        return bt

    cands = [bt for bt in range(8, B + 1, 8) if B % bt == 0] or [B]
    budget = 24 * 1024 * 1024                    # safe on v5e / v6e / v7x
    fit = [bt for bt in cands if ws_bytes(bt) <= budget] or [cands[0]]
    piped = [bt for bt in fit if B // bt >= 4]   # >=4 steps: DMA overlap + 2 TCs
    return max(piped or fit)


def attention_forward(last_hidden, encoder_outputs, seq_len=None, *,
                      method="dot", mlp=False, params=None, batch_tile=None):
    """Pallas port of Attention.forward for method in {'dot', 'general'}.

    last_hidden:      (B, H) float32 / bfloat16
    encoder_outputs:  (B, T, H) float32 / bfloat16
    seq_len:          optional (B,) int valid lengths (mask_3d semantics)
    Returns attention weights (B, T) float32.
    """
    B, T, H = encoder_outputs.shape
    assert last_hidden.shape == (B, H)
    assert method in ("dot", "general"), "only 'dot'/'general' implemented"
    params = params or {}
    use_mask = seq_len is not None

    # ---- Algebraic fold (tiny O(H^2)/O(B*H^2) work, outside the kernel) ----
    # W_total = W_phi @ W_a @ W_psi^T (subsets as applicable), so the psi key
    # projection — the dominant FLOP term and the big VMEM intermediate —
    # disappears from the kernel entirely.  Exact up to f32 re-association.
    w_total = None
    if mlp:
        w_total = params["w_phi"]
        if method == "general":
            w_total = w_total @ params["w_a"]
        w_total = w_total @ params["w_psi"].T
    elif method == "general":
        w_total = params["w_a"]

    q = last_hidden if w_total is None else last_hidden @ w_total
    q = q.astype(encoder_outputs.dtype)     # bf16 eo -> bf16 MXU operands

    eo_itemsize = jnp.dtype(encoder_outputs.dtype).itemsize
    bt = _choose_batch_tile(B, T, H, eo_itemsize, batch_tile)
    grid = (pl.cdiv(B, bt),)

    args = [q, encoder_outputs]
    in_specs = [
        pl.BlockSpec((bt, H), lambda i: (i, 0)),
        pl.BlockSpec((bt, T, H), lambda i: (i, 0, 0)),
    ]
    if use_mask:
        args.append(jnp.asarray(seq_len, jnp.int32).reshape(B, 1))
        in_specs.append(pl.BlockSpec((bt, 1), lambda i: (i, 0)))

    kernel = _make_attention_kernel(bt, T, use_mask)

    # Explicit VMEM budget: double-buffered tiles + headroom, clamped so it is
    # valid on v5e (16 MiB scoped default) through v7x (64 MiB physical).
    ws = 2 * (bt * T * H * eo_itemsize + bt * T * 4 + bt * H * eo_itemsize + bt * 4)
    vmem_limit = int(min(40 << 20, max(ws + (4 << 20), 16 << 20)))

    bytes_accessed = int(sum(a.size * a.dtype.itemsize for a in args) + B * T * 4)

    return pl.pallas_call(
        kernel,
        out_shape=jax.ShapeDtypeStruct((B, T), jnp.float32),
        grid=grid,
        in_specs=in_specs,
        out_specs=pl.BlockSpec((bt, T), lambda i: (i, 0)),
        compiler_params=pltpu.CompilerParams(
            dimension_semantics=("parallel",),
            vmem_limit_bytes=vmem_limit),
        cost_estimate=pl.CostEstimate(
            flops=int(2 * B * T * H),              # useful score FLOPs
            transcendentals=int(B * T),
            bytes_accessed=bytes_accessed),
    )(*args)


def attention_reference(last_hidden, encoder_outputs, seq_len=None, *,
                        method="dot", mlp=False, params=None):
    """Pure-JAX mirror of the PyTorch module (weights in (in, out) layout)."""
    params = params or {}
    lh, eo = last_hidden, encoder_outputs
    if mlp:
        lh = lh @ params["w_phi"]
        eo = eo @ params["w_psi"]
    x = lh @ params["w_a"] if method == "general" else lh
    scores = jnp.einsum("bth,bh->bt", eo, x)
    if seq_len is not None:
        t_idx = jnp.arange(eo.shape[1])[None, :]
        scores = jnp.where(t_idx < jnp.asarray(seq_len)[:, None], scores, -jnp.inf)
    return jax.nn.softmax(scores, axis=-1)


if __name__ == "__main__":
    # T, H lane-aligned (multiples of 128); B = 32 -> bt = 8 -> 4-step grid so
    # the encoder_outputs DMA pipelines and the parallel axis can use both TCs.
    B, T, H = 32, 256, 128

    root = jax.random.PRNGKey(0)
    k_lh, k_eo, k_phi, k_psi, k_a, k_len = jax.random.split(root, 6)

    last_hidden = jax.random.normal(k_lh, (B, H), jnp.float32)
    encoder_outputs = jax.random.normal(k_eo, (B, T, H), jnp.float32)
    seq_len = jax.random.randint(k_len, (B,), 1, T + 1, dtype=jnp.int32)

    bound = 1.0 / jnp.sqrt(H)  # matches nn.Linear U(-1/sqrt(fan_in), 1/sqrt(fan_in))
    params = dict(
        w_phi=jax.random.uniform(k_phi, (H, H), jnp.float32, -bound, bound),
        w_psi=jax.random.uniform(k_psi, (H, H), jnp.float32, -bound, bound),
        w_a=jax.random.uniform(k_a, (H, H), jnp.float32, -bound, bound),
    )

    # jit the wrapper so the tiny folded projection fuses with the pallas_call.
    attn = jax.jit(attention_forward,
                   static_argnames=("method", "mlp", "batch_tile"))

    # 1) Default config: method='dot', mlp=False, no masking (fp32).
    out_dot = jax.block_until_ready(
        attn(last_hidden, encoder_outputs, method="dot", mlp=False))
    ref_dot = attention_reference(last_hidden, encoder_outputs,
                                  method="dot", mlp=False)
    assert out_dot.shape == (B, T)
    assert jnp.allclose(out_dot, ref_dot, atol=1e-4, rtol=1e-4)
    assert jnp.allclose(out_dot.sum(-1), 1.0, atol=1e-4)

    # 2) method='general', mlp=True, with seq_len masking (fp32).
    out_gen = jax.block_until_ready(
        attn(last_hidden, encoder_outputs, seq_len,
             method="general", mlp=True, params=params))
    ref_gen = attention_reference(last_hidden, encoder_outputs, seq_len,
                                  method="general", mlp=True, params=params)
    assert out_gen.shape == (B, T)
    assert jnp.allclose(out_gen, ref_gen, atol=1e-4, rtol=1e-4)
    assert jnp.allclose(out_gen.sum(-1), 1.0, atol=1e-4)
    t_idx = jnp.arange(T)[None, :]
    assert jnp.all(jnp.where(t_idx >= seq_len[:, None], out_gen, 0.0) == 0.0)

    # 3) bf16 encoder outputs (halves HBM traffic / VMEM tiles; bf16 MXU with
    #    f32 accumulation, f32 softmax).  Loose tolerance vs the f32 reference.
    out_bf16 = jax.block_until_ready(
        attn(last_hidden.astype(jnp.bfloat16),
             encoder_outputs.astype(jnp.bfloat16), seq_len,
             method="general", mlp=True, params=params))
    assert out_bf16.shape == (B, T)
    assert jnp.allclose(out_bf16.sum(-1), 1.0, atol=1e-3)
    assert jnp.allclose(out_bf16, ref_gen, atol=5e-2)

    print("KERNEL_OK")
</pallas_src>

<mosaic_0001>
module attributes {stable_mosaic.version = 11 : i64} {
  func.func @kernel(%arg0: i32, %arg1: memref<8x128xf32, #tpu.memory_space<vmem>>, %arg2: memref<8x256x128xf32, #tpu.memory_space<vmem>>, %arg3: memref<8x256xf32, #tpu.memory_space<vmem>>) attributes {dimension_semantics = [#tpu.dimension_semantics<parallel>], iteration_bounds = array<i64: 4>, scalar_prefetch = 0 : i64, scratch_operands = 0 : i64, tpu.core_type = #tpu.core_type<tc>, window_params = [{transform_indices = @transform_0, window_bounds = array<i64: 8, 128>}, {transform_indices = @transform_1, window_bounds = array<i64: 8, 256, 128>}, {transform_indices = @transform_2, window_bounds = array<i64: 8, 256>}]} {
    %c0 = arith.constant 0 : index
    %c0_0 = arith.constant 0 : index
    %0 = vector.load %arg1[%c0, %c0_0] : memref<8x128xf32, #tpu.memory_space<vmem>>, vector<8x128xf32>
    %1 = tpu.iota {dimensions = array<i32: 0>} : vector<8x256xi32>
    %cst = arith.constant 0.000000e+00 : f32
    %2 = vector.broadcast %cst : f32 to vector<8x256xf32>
    %c0_1 = arith.constant 0 : index
    %c0_2 = arith.constant 0 : index
    %c0_3 = arith.constant 0 : index
    %3 = vector.load %arg2[%c0_1, %c0_2, %c0_3] : memref<8x256x128xf32, #tpu.memory_space<vmem>>, vector<1x256x128xf32>
    %4 = vector.shape_cast %3 : vector<1x256x128xf32> to vector<256x128xf32>
    %cst_4 = arith.constant dense<0.000000e+00> : vector<8x256xf32>
    %5 = tpu.matmul %0, %4, %cst_4 {dimension_numbers = #tpu.dot_dimension_numbers<[1], [1], [0], [0], [0, 0, 1, 0], [], []>} : vector<8x128xf32>, vector<256x128xf32>, vector<8x256xf32> -> vector<8x256xf32>
    %c0_i32 = arith.constant 0 : i32
    %6 = vector.broadcast %c0_i32 : i32 to vector<8x256xi32>
    %7 = arith.cmpi eq, %1, %6 : vector<8x256xi32>
    %8 = arith.select %7, %5, %2 : vector<8x256xi1>, vector<8x256xf32>
    %c1 = arith.constant 1 : index
    %c0_5 = arith.constant 0 : index
    %c0_6 = arith.constant 0 : index
    %9 = vector.load %arg2[%c1, %c0_5, %c0_6] : memref<8x256x128xf32, #tpu.memory_space<vmem>>, vector<1x256x128xf32>
    %10 = vector.shape_cast %9 : vector<1x256x128xf32> to vector<256x128xf32>
    %cst_7 = arith.constant dense<0.000000e+00> : vector<8x256xf32>
    %11 = tpu.matmul %0, %10, %cst_7 {dimension_numbers = #tpu.dot_dimension_numbers<[1], [1], [0], [0], [0, 0, 1, 0], [], []>} : vector<8x128xf32>, vector<256x128xf32>, vector<8x256xf32> -> vector<8x256xf32>
    %c1_i32 = arith.constant 1 : i32
    %12 = vector.broadcast %c1_i32 : i32 to vector<8x256xi32>
    %13 = arith.cmpi eq, %1, %12 : vector<8x256xi32>
    %14 = arith.select %13, %11, %8 : vector<8x256xi1>, vector<8x256xf32>
    %c2 = arith.constant 2 : index
    %c0_8 = arith.constant 0 : index
    %c0_9 = arith.constant 0 : index
    %15 = vector.load %arg2[%c2, %c0_8, %c0_9] : memref<8x256x128xf32, #tpu.memory_space<vmem>>, vector<1x256x128xf32>
    %16 = vector.shape_cast %15 : vector<1x256x128xf32> to vector<256x128xf32>
    %cst_10 = arith.constant dense<0.000000e+00> : vector<8x256xf32>
    %17 = tpu.matmul %0, %16, %cst_10 {dimension_numbers = #tpu.dot_dimension_numbers<[1], [1], [0], [0], [0, 0, 1, 0], [], []>} : vector<8x128xf32>, vector<256x128xf32>, vector<8x256xf32> -> vector<8x256xf32>
    %c2_i32 = arith.constant 2 : i32
    %18 = vector.broadcast %c2_i32 : i32 to vector<8x256xi32>
    %19 = arith.cmpi eq, %1, %18 : vector<8x256xi32>
    %20 = arith.select %19, %17, %14 : vector<8x256xi1>, vector<8x256xf32>
    %c3 = arith.constant 3 : index
    %c0_11 = arith.constant 0 : index
    %c0_12 = arith.constant 0 : index
    %21 = vector.load %arg2[%c3, %c0_11, %c0_12] : memref<8x256x128xf32, #tpu.memory_space<vmem>>, vector<1x256x128xf32>
    %22 = vector.shape_cast %21 : vector<1x256x128xf32> to vector<256x128xf32>
    %cst_13 = arith.constant dense<0.000000e+00> : vector<8x256xf32>
    %23 = tpu.matmul %0, %22, %cst_13 {dimension_numbers = #tpu.dot_dimension_numbers<[1], [1], [0], [0], [0, 0, 1, 0], [], []>} : vector<8x128xf32>, vector<256x128xf32>, vector<8x256xf32> -> vector<8x256xf32>
    %c3_i32 = arith.constant 3 : i32
    %24 = vector.broadcast %c3_i32 : i32 to vector<8x256xi32>
    %25 = arith.cmpi eq, %1, %24 : vector<8x256xi32>
    %26 = arith.select %25, %23, %20 : vector<8x256xi1>, vector<8x256xf32>
    %c4 = arith.constant 4 : index
    %c0_14 = arith.constant 0 : index
    %c0_15 = arith.constant 0 : index
    %27 = vector.load %arg2[%c4, %c0_14, %c0_15] : memref<8x256x128xf32, #tpu.memory_space<vmem>>, vector<1x256x128xf32>
    %28 = vector.shape_cast %27 : vector<1x256x128xf32> to vector<256x128xf32>
    %cst_16 = arith.constant dense<0.000000e+00> : vector<8x256xf32>
    %29 = tpu.matmul %0, %28, %cst_16 {dimension_numbers = #tpu.dot_dimension_numbers<[1], [1], [0], [0], [0, 0, 1, 0], [], []>} : vector<8x128xf32>, vector<256x128xf32>, vector<8x256xf32> -> vector<8x256xf32>
    %c4_i32 = arith.constant 4 : i32
    %30 = vector.broadcast %c4_i32 : i32 to vector<8x256xi32>
    %31 = arith.cmpi eq, %1, %30 : vector<8x256xi32>
    %32 = arith.select %31, %29, %26 : vector<8x256xi1>, vector<8x256xf32>
    %c5 = arith.constant 5 : index
    %c0_17 = arith.constant 0 : index
    %c0_18 = arith.constant 0 : index
    %33 = vector.load %arg2[%c5, %c0_17, %c0_18] : memref<8x256x128xf32, #tpu.memory_space<vmem>>, vector<1x256x128xf32>
    %34 = vector.shape_cast %33 : vector<1x256x128xf32> to vector<256x128xf32>
    %cst_19 = arith.constant dense<0.000000e+00> : vector<8x256xf32>
    %35 = tpu.matmul %0, %34, %cst_19 {dimension_numbers = #tpu.dot_dimension_numbers<[1], [1], [0], [0], [0, 0, 1, 0], [], []>} : vector<8x128xf32>, vector<256x128xf32>, vector<8x256xf32> -> vector<8x256xf32>
    %c5_i32 = arith.constant 5 : i32
    %36 = vector.broadcast %c5_i32 : i32 to vector<8x256xi32>
    %37 = arith.cmpi eq, %1, %36 : vector<8x256xi32>
    %38 = arith.select %37, %35, %32 : vector<8x256xi1>, vector<8x256xf32>
    %c6 = arith.constant 6 : index
    %c0_20 = arith.constant 0 : index
    %c0_21 = arith.constant 0 : index
    %39 = vector.load %arg2[%c6, %c0_20, %c0_21] : memref<8x256x128xf32, #tpu.memory_space<vmem>>, vector<1x256x128xf32>
    %40 = vector.shape_cast %39 : vector<1x256x128xf32> to vector<256x128xf32>
    %cst_22 = arith.constant dense<0.000000e+00> : vector<8x256xf32>
    %41 = tpu.matmul %0, %40, %cst_22 {dimension_numbers = #tpu.dot_dimension_numbers<[1], [1], [0], [0], [0, 0, 1, 0], [], []>} : vector<8x128xf32>, vector<256x128xf32>, vector<8x256xf32> -> vector<8x256xf32>
    %c6_i32 = arith.constant 6 : i32
    %42 = vector.broadcast %c6_i32 : i32 to vector<8x256xi32>
    %43 = arith.cmpi eq, %1, %42 : vector<8x256xi32>
    %44 = arith.select %43, %41, %38 : vector<8x256xi1>, vector<8x256xf32>
    %c7 = arith.constant 7 : index
    %c0_23 = arith.constant 0 : index
    %c0_24 = arith.constant 0 : index
    %45 = vector.load %arg2[%c7, %c0_23, %c0_24] : memref<8x256x128xf32, #tpu.memory_space<vmem>>, vector<1x256x128xf32>
    %46 = vector.shape_cast %45 : vector<1x256x128xf32> to vector<256x128xf32>
    %cst_25 = arith.constant dense<0.000000e+00> : vector<8x256xf32>
    %47 = tpu.matmul %0, %46, %cst_25 {dimension_numbers = #tpu.dot_dimension_numbers<[1], [1], [0], [0], [0, 0, 1, 0], [], []>} : vector<8x128xf32>, vector<256x128xf32>, vector<8x256xf32> -> vector<8x256xf32>
    %c7_i32 = arith.constant 7 : i32
    %48 = vector.broadcast %c7_i32 : i32 to vector<8x256xi32>
    %49 = arith.cmpi eq, %1, %48 : vector<8x256xi32>
    %50 = arith.select %49, %47, %44 : vector<8x256xi1>, vector<8x256xf32>
    %cst_26 = arith.constant dense<0xFF800000> : vector<8xf32>
    %51 = vector.multi_reduction <maximumf>, %50, %cst_26 [1] : vector<8x256xf32> to vector<8xf32>
    %52 = vector.shape_cast %51 : vector<8xf32> to vector<8x1xf32>
    %cst_27 = arith.constant -1.000000e+30 : f32
    %53 = vector.broadcast %cst_27 : f32 to vector<8x1xf32>
    %54 = arith.maximumf %52, %53 : vector<8x1xf32>
    %55 = vector.broadcast %54 : vector<8x1xf32> to vector<8x256xf32>
    %56 = arith.subf %50, %55 : vector<8x256xf32>
    %57 = math.exp %56 : vector<8x256xf32>
    %cst_28 = arith.constant dense<0.000000e+00> : vector<8xf32>
    %58 = vector.multi_reduction <add>, %57, %cst_28 [1] : vector<8x256xf32> to vector<8xf32>
    %59 = vector.shape_cast %58 : vector<8xf32> to vector<8x1xf32>
    %cst_29 = arith.constant 1.000000e-30 : f32
    %60 = vector.broadcast %cst_29 : f32 to vector<8x1xf32>
    %61 = arith.maximumf %59, %60 : vector<8x1xf32>
    %62 = tpu.reciprocal %61 : vector<8x1xf32> -> vector<8x1xf32>
    %63 = vector.broadcast %62 : vector<8x1xf32> to vector<8x256xf32>
    %64 = arith.mulf %57, %63 : vector<8x256xf32>
    %c0_30 = arith.constant 0 : index
    %c0_31 = arith.constant 0 : index
    %65 = vector.load %arg3[%c0_30, %c0_31] : memref<8x256xf32, #tpu.memory_space<vmem>>, vector<8x256xf32>
    tpu.vector_store %arg3[%c0_30, %c0_31], %64 {strides = array<i32>} : memref<8x256xf32, #tpu.memory_space<vmem>>, vector<8x256xf32>,
    return
  }
  func.func @transform_0(%arg0: i32) -> (i32, i32) {
    %c0_i32 = arith.constant 0 : i32
    %c0_i32_0 = arith.constant 0 : i32
    return %arg0, %c0_i32 : i32, i32
  }
  func.func @transform_1(%arg0: i32) -> (i32, i32, i32) {
    %c0_i32 = arith.constant 0 : i32
    %c0_i32_0 = arith.constant 0 : i32
    %c0_i32_1 = arith.constant 0 : i32
    return %arg0, %c0_i32, %c0_i32_0 : i32, i32, i32
  }
  func.func @transform_2(%arg0: i32) -> (i32, i32) {
    %c0_i32 = arith.constant 0 : i32
    %c0_i32_0 = arith.constant 0 : i32
    return %arg0, %c0_i32 : i32, i32
  }
}

</mosaic_0001>

<llo_original>
// kernel: attention_forward.1
$region0: #{attention_forward.1}
  #allocation0 [shape = 'u32[]', space=smem, size = 0x4, offset = 0x4, fixed_abs, tag = 'smem constant byte address 0x4 - core index']
  #allocation1 [shape = 'u32[144,128]{1,0:T(1,128)}', space=vmem, size = 0x12000, scoped, tag = 'internal scratch']
  %s0 = inlined_call_operand.hbm [shape: f32[32,128], index: 0, kind: input, shape index: {}]
  %s1 = inlined_call_operand.hbm [shape: f32[32,256,128], index: 1, kind: input, shape index: {}]
  %s2 = inlined_call_operand.hbm [shape: f32[32,256], index: 2, kind: output, shape index: {}]
  %s3 = sld [smem:[#allocation0]]
  $region49: #{attention_forward.1} parent=0
    _
  %s5 = ssub.s32 1, %s3
  %s6 = scalar_select 0, %s5, %s3
  $region1: #{attention_forward.1} parent=0
    #allocation2 [shape = 'u8[8192]{0}', space=vmem, size = 0x2000, scoped, tag = 'input window, operand 0']
    #allocation3 [shape = 's32[2]{0}', space=sflag, size = 0x8, scoped, tag = 'scoped memory for attention_forward.1']
    #allocation4 [shape = 's32[2]{0}', space=sflag, size = 0x8, scoped, tag = 'scoped memory for attention_forward.1']
    #allocation5 [shape = 'u8[2097152]{0}', space=vmem, size = 0x200000, scoped, tag = 'input window, operand 1']
    #allocation6 [shape = 's32[2]{0}', space=sflag, size = 0x8, scoped, tag = 'scoped memory for attention_forward.1']
    #allocation7 [shape = 'u8[16384]{0}', space=vmem, size = 0x4000, scoped, tag = 'output window, operand 0']
    %7 = vsyncpa [#allocation3], 0
    %s8 = scalar_lea.sflag [#allocation3], 1
    %9 = vsyncpa %s8, 0
    %10 = vsyncpa [#allocation6], 0
    %s11 = scalar_lea.sflag [#allocation6], 1
    %12 = vsyncpa %s11, 0
    %13 = vsyncpa [#allocation4], 0
    %s14 = scalar_lea.sflag [#allocation4], 1
    %15 = vsyncpa %s14, 0
    loop: start=0, step=1, limit=6
    $region2: #{attention_forward.1} parent=1 // loop_pre_header
      _
    $region3: #{attention_forward.1} parent=1 // loop_header
      %s17 = sphi 0, %s21
      %p18 = scmp.ge.s32.totalorder %s17, 6
      %s27 = sphi 0, %s29
      %s30 = sphi 0, %s27
      %s31 = sphi 0, %s30
      %s47 = sphi 0, %s31
      %s53 = sphi 0, %s55
      %s56 = sphi 0, %s53
      %s57 = sphi 0, %s56
      %s73 = sphi 0, %s57
      %s79 = sphi 0, %s81
      %s82 = sphi 0, %s79
      %s83 = sphi 0, %s82
      %s99 = sphi 0, %s83
    $region4: #{attention_forward.1} parent=1 // loop_header_branch
      %20 = sbr.rel (%p18) target = $region8
    $region5: #{attention_forward.1} parent=1 // loop_body
      %s22 = ssub.s32 %s17, 1
      %s23 = ssub.s32 %s17, 2
      %s24 = sadd.s32 %s17, 1
      %s25 = ssub.s32 %s17, %s24
      %p26 = scmp.eq.s32.totalorder %s25, 0
      %s28 = sadd.s32 %s27, 1
      %s29 = scalar_select %p26, %s27, %s28
      %p32 = pneg %p26
      %p33 = scmp.eq.s32.totalorder %s17, 3
      %p34 = por %p32, %p33
      %p35 = scmp.ne.s32.totalorder %s27, %s30
      %p36 = scmp.eq.s32.totalorder %s17, 0
      %p37 = por %p35, %p36
      %p38 = scmp.ne.s32.totalorder %s27, %s30
      %p39 = scmp.eq.s32.totalorder %s22, 3
      %p40 = por %p38, %p39
      %p41 = scmp.ne.s32.totalorder %s30, %s31
      %p42 = scmp.eq.s32.totalorder %s22, 0
      %p43 = por %p41, %p42
      %p44 = scmp.ne.s32.totalorder %s30, %s31
      %p45 = scmp.eq.s32.totalorder %s23, 3
      %p46 = por %p44, %p45
      %p48 = scmp.ne.s32.totalorder %s31, %s47
      %p49 = scmp.eq.s32.totalorder %s23, 0
      %p50 = por %p48, %p49
      %s51 = ssub.s32 %s17, %s24
      %p52 = scmp.eq.s32.totalorder %s51, 0
      %s54 = sadd.s32 %s53, 1
      %s55 = scalar_select %p52, %s53, %s54
      %p58 = pneg %p52
      %p59 = scmp.eq.s32.totalorder %s17, 3
      %p60 = por %p58, %p59
      %p61 = scmp.ne.s32.totalorder %s53, %s56
      %p62 = scmp.eq.s32.totalorder %s17, 0
      %p63 = por %p61, %p62
      %p64 = scmp.ne.s32.totalorder %s53, %s56
      %p65 = scmp.eq.s32.totalorder %s22, 3
      %p66 = por %p64, %p65
      %p67 = scmp.ne.s32.totalorder %s56, %s57
      %p68 = scmp.eq.s32.totalorder %s22, 0
      %p69 = por %p67, %p68
      %p70 = scmp.ne.s32.totalorder %s56, %s57
      %p71 = scmp.eq.s32.totalorder %s23, 3
      %p72 = por %p70, %p71
      %p74 = scmp.ne.s32.totalorder %s57, %s73
      %p75 = scmp.eq.s32.totalorder %s23, 0
      %p76 = por %p74, %p75
      %s77 = ssub.s32 %s17, %s24
      %p78 = scmp.eq.s32.totalorder %s77, 0
      %s80 = sadd.s32 %s79, 1
      %s81 = scalar_select %p78, %s79, %s80
      %p84 = pneg %p78
      %p85 = scmp.eq.s32.totalorder %s17, 3
      %p86 = por %p84, %p85
      %p87 = scmp.ne.s32.totalorder %s79, %s82
      %p88 = scmp.eq.s32.totalorder %s17, 0
      %p89 = por %p87, %p88
      %p90 = scmp.ne.s32.totalorder %s79, %s82
      %p91 = scmp.eq.s32.totalorder %s22, 3
      %p92 = por %p90, %p91
      %p93 = scmp.ne.s32.totalorder %s82, %s83
      %p94 = scmp.eq.s32.totalorder %s22, 0
      %p95 = por %p93, %p94
      %p96 = scmp.ne.s32.totalorder %s82, %s83
      %p97 = scmp.eq.s32.totalorder %s23, 3
      %p98 = por %p96, %p97
      %p100 = scmp.ne.s32.totalorder %s83, %s99
      %p101 = scmp.eq.s32.totalorder %s23, 0
      %p102 = por %p100, %p101
      %p103 = scmp.le.s32.totalorder 1, %s17
      %p104 = scmp.lt.s32.totalorder %s17, 5
      %p105 = pnand %p103, %p104
      %p106 = pneg %p105
      // Predicated region
      $region9: #{attention_forward.1} parent=5 // pred_check
        _
      $region10: #{attention_forward.1} parent=5 // pred_check_branch
        %108 = sbr.rel (%p105) target = $region12
      $region11: #{attention_forward.1} parent=5 // pred_region
        %s109 = ssub.s32 %s17, 1
      $region12: #{attention_forward.1} parent=5 // pred_fallthru
        _
      %p110 = scmp.lt.s32.totalorder %s17, 4
      // Predicated region
      $region13: #{attention_forward.1} parent=5 // pred_check
        %p111 = pneg %p110
      $region14: #{attention_forward.1} parent=5 // pred_check_branch
        %113 = sbr.rel (%p111) target = $region16
      $region15: #{attention_forward.1} parent=5 // pred_region
        // Predicated region
        $region17: #{attention_forward.1} parent=15 // pred_check
          %p114 = pneg %p37
        $region18: #{attention_forward.1} parent=15 // pred_check_branch
          %116 = sbr.rel (%p114) target = $region20
        $region19: #{attention_forward.1} parent=15 // pred_region
          %s117 = sand.u32 %s27, 1
          %s118 = scalar_lea.sflag [#allocation3], %s117
          %s119 = sand.u32 %s27, 1
          %s120 = smul.addr %s119, 8
          %s121 = scalar_lea.vmem [#allocation2], %s120
          %s123 = ssub.s32 128, 128
          %124 = vsyncadd %s118, %s123
          %s125 = smul.addr %s17, 128
          %s126 = scalar_lea.hbm %s0, %s125
          %s128 = sshll.u32 %s121, 4
          %s129 = int_to_ptr.vmem [resolvable:$true] %s128
          %131 = dma.hbm_to_vmem [thread:$0]  %s126, 128, %s129, %s118
        $region20: #{attention_forward.1} parent=15 // pred_fallthru
          _
        // Predicated region
        $region21: #{attention_forward.1} parent=15 // pred_check
          %p132 = pneg %p63
        $region22: #{attention_forward.1} parent=15 // pred_check_branch
          %134 = sbr.rel (%p132) target = $region24
        $region23: #{attention_forward.1} parent=15 // pred_region
          %s135 = sand.u32 %s53, 1
          %s136 = scalar_lea.sflag [#allocation6], %s135
          %s137 = sand.u32 %s53, 1
          %s138 = smul.addr %s137, 2048
          %s139 = scalar_lea.vmem [#allocation5], %s138
          %s140 = smul.u32 8, %s17
          %s142 = ssub.s32 32768, 32768
          %143 = vsyncadd %s136, %s142
          %s144 = smul.addr %s140, 32
          %s145 = smul.addr %s144, 128
          %s146 = scalar_lea.hbm %s1, %s145
          %s147 = sshll.u32 %s139, 4
          %s148 = int_to_ptr.vmem [resolvable:$true] %s147
          %153 = dma.hbm_to_vmem [thread:$0]  %s146, 32768, %s148, %s136, 128, 128, 8
        $region24: #{attention_forward.1} parent=15 // pred_fallthru
          _
      $region16: #{attention_forward.1} parent=5 // pred_fallthru
        _
      %p154 = scmp.le.s32.totalorder 1, %s17
      %p155 = scmp.lt.s32.totalorder %s17, 5
      %p156 = pnand %p154, %p155
      %p157 = pneg %p156
      // Predicated region
      $region25: #{attention_forward.1} parent=5 // pred_check
        _
      $region26: #{attention_forward.1} parent=5 // pred_check_branch
        %159 = sbr.rel (%p156) target = $region28
      $region27: #{attention_forward.1} parent=5 // pred_region
        %s160 = ssub.s32 %s17, 1
        %s161 = sand.u32 %s30, 1
        %s162 = scalar_lea.sflag [#allocation3], %s161
        %s163 = sand.u32 %s30, 1
        %s164 = smul.addr %s163, 8
        %s165 = scalar_lea.vmem [#allocation2], %s164
        // Predicated region
        $region29: #{attention_forward.1} parent=27 // pred_check
          %p166 = pneg %p43
        $region30: #{attention_forward.1} parent=27 // pred_check_branch
          %168 = sbr.rel (%p166) target = $region32
        $region31: #{attention_forward.1} parent=27 // pred_region
          %169 = dma.done %s162, 128
        $region32: #{attention_forward.1} parent=27 // pred_fallthru
          _
        %s170 = sand.u32 %s56, 1
        %s171 = scalar_lea.sflag [#allocation6], %s170
        %s172 = sand.u32 %s56, 1
        %s173 = smul.addr %s172, 2048
        %s174 = scalar_lea.vmem [#allocation5], %s173
        // Predicated region
        $region33: #{attention_forward.1} parent=27 // pred_check
          %p175 = pneg %p69
        $region34: #{attention_forward.1} parent=27 // pred_check_branch
          %177 = sbr.rel (%p175) target = $region36
        $region35: #{attention_forward.1} parent=27 // pred_region
          %178 = dma.done %s171, 32768
        $region36: #{attention_forward.1} parent=27 // pred_fallthru
          _
        %s179 = sand.u32 %s30, 1
        %s180 = scalar_lea.sflag [#allocation3], %s179
        %s181 = sand.u32 %s30, 1
        %s182 = smul.addr %s181, 8
        %s183 = scalar_lea.vmem [#allocation2], %s182
        %p184 = pneg %p43
        %p185 = pneg %p40
        %s186 = sand.u32 %s56, 1
        %s187 = scalar_lea.sflag [#allocation6], %s186
        %s188 = sand.u32 %s56, 1
        %s189 = smul.addr %s188, 2048
        %s190 = scalar_lea.vmem [#allocation5], %s189
        %p191 = pneg %p69
        %p192 = pneg %p66
        %p193 = pneg %p95
        %p194 = pneg %p92
        %s195 = sand.u32 %s82, 1
        %s196 = scalar_lea.sflag [#allocation4], %s195
        %s197 = sand.u32 %s82, 1
        %s198 = smul.addr %s197, 16
        %s199 = scalar_lea.vmem [#allocation7], %s198
        %s200 = smul.u32 8, %s22
        %v201 = vld [vmem:[%s165] sm:$0xff]
        %v202 = vlaneseq
        %v203 = vshrl.u32 %v202, 7
        %v204 = vld [vmem:[%s174] sm:$0xff]
        %v205 = vld [vmem:[%s174 + $0x8] sm:$0xff]
        %v206 = vld [vmem:[%s174 + $0x10] sm:$0xff]
        %v207 = vld [vmem:[%s174 + $0x18] sm:$0xff]
        %v208 = vld [vmem:[%s174 + $0x20] sm:$0xff]
        %v209 = vld [vmem:[%s174 + $0x28] sm:$0xff]
        %v210 = vld [vmem:[%s174 + $0x30] sm:$0xff]
        %v211 = vld [vmem:[%s174 + $0x38] sm:$0xff]
        %v212 = vld [vmem:[%s174 + $0x40] sm:$0xff]
        %v213 = vld [vmem:[%s174 + $0x48] sm:$0xff]
        %v214 = vld [vmem:[%s174 + $0x50] sm:$0xff]
        %v215 = vld [vmem:[%s174 + $0x58] sm:$0xff]
        %v216 = vld [vmem:[%s174 + $0x60] sm:$0xff]
        %v217 = vld [vmem:[%s174 + $0x68] sm:$0xff]
        %v218 = vld [vmem:[%s174 + $0x70] sm:$0xff]
        %v219 = vld [vmem:[%s174 + $0x78] sm:$0xff]
        %v220 = vld [vmem:[%s174 + $0x80] sm:$0xff]
        %v221 = vld [vmem:[%s174 + $0x88] sm:$0xff]
        %v222 = vld [vmem:[%s174 + $0x90] sm:$0xff]
        %v223 = vld [vmem:[%s174 + $0x98] sm:$0xff]
        %v224 = vld [vmem:[%s174 + $0xa0] sm:$0xff]
        %v225 = vld [vmem:[%s174 + $0xa8] sm:$0xff]
        %v226 = vld [vmem:[%s174 + $0xb0] sm:$0xff]
        %v227 = vld [vmem:[%s174 + $0xb8] sm:$0xff]
        %v228 = vld [vmem:[%s174 + $0xc0] sm:$0xff]
        %v229 = vld [vmem:[%s174 + $0xc8] sm:$0xff]
        %v230 = vld [vmem:[%s174 + $0xd0] sm:$0xff]
        %v231 = vld [vmem:[%s174 + $0xd8] sm:$0xff]
        %v232 = vld [vmem:[%s174 + $0xe0] sm:$0xff]
        %v233 = vld [vmem:[%s174 + $0xe8] sm:$0xff]
        %v234 = vld [vmem:[%s174 + $0xf0] sm:$0xff]
        %v235 = vld [vmem:[%s174 + $0xf8] sm:$0xff]
        %236 = vmatprep.subr.mxu0 0.0
        %237 = vmatpush1.xpose.msra.mxu0 %v219
        %238 = vmatprep.subr.mxu0 0.0
        %239 = vmatpush1.xpose.msra.mxu0 %v218
        %240 = vmatprep.subr.mxu0 0.0
        %241 = vmatpush1.xpose.msra.mxu0 %v217
        %242 = vmatprep.subr.mxu0 0.0
        %243 = vmatpush1.xpose.msra.mxu0 %v216
        %244 = vmatprep.subr.mxu0 0.0
        %245 = vmatpush1.xpose.msra.mxu0 %v215
        %246 = vmatprep.subr.mxu0 0.0
        %247 = vmatpush1.xpose.msra.mxu0 %v214
        %248 = vmatprep.subr.mxu0 0.0
        %249 = vmatpush1.xpose.msra.mxu0 %v213
        %250 = vmatprep.subr.mxu0 0.0
        %251 = vmatpush1.xpose.msra.mxu0 %v212
        %252 = vmatprep.subr.mxu0 0.0
        %253 = vmatpush1.xpose.msra.mxu0 %v211
        %254 = vmatprep.subr.mxu0 0.0
        %255 = vmatpush1.xpose.msra.mxu0 %v210
        %256 = vmatprep.subr.mxu0 0.0
        %257 = vmatpush1.xpose.msra.mxu0 %v209
        %258 = vmatprep.subr.mxu0 0.0
        %259 = vmatpush1.xpose.msra.mxu0 %v208
        %260 = vmatprep.subr.mxu0 0.0
        %261 = vmatpush1.xpose.msra.mxu0 %v207
        %262 = vmatprep.subr.mxu0 0.0
        %263 = vmatpush1.xpose.msra.mxu0 %v206
        %264 = vmatprep.subr.mxu0 0.0
        %265 = vmatpush1.xpose.msra.mxu0 %v205
        %266 = vmatprep.subr.mxu0 0.0
        %267 = vmatpush1.xpose.msra.mxu0 %v204
        %268 = vmatprep.subr.mxu0 0.0
        %269 = vmatpush2.xpose.msra.mxu0 %v235
        %270 = vmatprep.subr.mxu0 0.0
        %271 = vmatpush2.xpose.msra.mxu0 %v234
        %272 = vmatprep.subr.mxu0 0.0
        %273 = vmatpush2.xpose.msra.mxu0 %v233
        %274 = vmatprep.subr.mxu0 0.0
        %275 = vmatpush2.xpose.msra.mxu0 %v232
        %276 = vmatprep.subr.mxu0 0.0
        %277 = vmatpush2.xpose.msra.mxu0 %v231
        %278 = vmatprep.subr.mxu0 0.0
        %279 = vmatpush2.xpose.msra.mxu0 %v230
        %280 = vmatprep.subr.mxu0 0.0
        %281 = vmatpush2.xpose.msra.mxu0 %v229
        %282 = vmatprep.subr.mxu0 0.0
        %283 = vmatpush2.xpose.msra.mxu0 %v228
        %284 = vmatprep.subr.mxu0 0.0
        %285 = vmatpush2.xpose.msra.mxu0 %v227
        %286 = vmatprep.subr.mxu0 0.0
        %287 = vmatpush2.xpose.msra.mxu0 %v226
        %288 = vmatprep.subr.mxu0 0.0
        %289 = vmatpush2.xpose.msra.mxu0 %v225
        %290 = vmatprep.subr.mxu0 0.0
        %291 = vmatpush2.xpose.msra.mxu0 %v224
        %292 = vmatprep.subr.mxu0 0.0
        %293 = vmatpush2.xpose.msra.mxu0 %v223
        %294 = vmatprep.subr.mxu0 0.0
        %295 = vmatpush2.xpose.msra.mxu0 %v222
        %296 = vmatprep.subr.mxu0 0.0
        %297 = vmatpush2.xpose.msra.mxu0 %v221
        %298 = vmatprep.subr.mxu0 0.0
        %299 = vmatpush2.xpose.msra.mxu0 %v220
        %300 = vmatprep.mubr.f32.mxu0 0.0
        %301 = vmatmul.mubr.f32.gmra.mxu0 %v201
        %v302 = vpop.f32.mrf.mxu0
        %v303 = vadd.f32 0.0, %v302
        %v304 = vpop.f32.mrf.mxu0
        %v305 = vadd.f32 0.0, %v304
        %306 = vdwg.mxu0
        %vm307 = vcmp.eq.s32.totalorder %v203, 0
        %v308 = vsel %vm307, %v303, 0.0
        %v309 = vsel %vm307, %v305, 0.0
        %s310 = scalar_lea.vmem %s174, 256 [#allocation5]
        %v311 = vld [vmem:[%s310] sm:$0xff]
        %v312 = vld [vmem:[%s310 + $0x8] sm:$0xff]
        %v313 = vld [vmem:[%s310 + $0x10] sm:$0xff]
        %v314 = vld [vmem:[%s310 + $0x18] sm:$0xff]
        %v315 = vld [vmem:[%s310 + $0x20] sm:$0xff]
        %v316 = vld [vmem:[%s310 + $0x28] sm:$0xff]
        %v317 = vld [vmem:[%s310 + $0x30] sm:$0xff]
        %v318 = vld [vmem:[%s310 + $0x38] sm:$0xff]
        %v319 = vld [vmem:[%s310 + $0x40] sm:$0xff]
        %v320 = vld [vmem:[%s310 + $0x48] sm:$0xff]
        %v321 = vld [vmem:[%s310 + $0x50] sm:$0xff]
        %v322 = vld [vmem:[%s310 + $0x58] sm:$0xff]
        %v323 = vld [vmem:[%s310 + $0x60] sm:$0xff]
        %v324 = vld [vmem:[%s310 + $0x68] sm:$0xff]
        %v325 = vld [vmem:[%s310 + $0x70] sm:$0xff]
        %v326 = vld [vmem:[%s310 + $0x78] sm:$0xff]
        %v327 = vld [vmem:[%s310 + $0x80] sm:$0xff]
        %v328 = vld [vmem:[%s310 + $0x88] sm:$0xff]
        %v329 = vld [vmem:[%s310 + $0x90] sm:$0xff]
        %v330 = vld [vmem:[%s310 + $0x98] sm:$0xff]
        %v331 = vld [vmem:[%s310 + $0xa0] sm:$0xff]
        %v332 = vld [vmem:[%s310 + $0xa8] sm:$0xff]
        %v333 = vld [vmem:[%s310 + $0xb0] sm:$0xff]
        %v334 = vld [vmem:[%s310 + $0xb8] sm:$0xff]
        %v335 = vld [vmem:[%s310 + $0xc0] sm:$0xff]
        %v336 = vld [vmem:[%s310 + $0xc8] sm:$0xff]
        %v337 = vld [vmem:[%s310 + $0xd0] sm:$0xff]
        %v338 = vld [vmem:[%s310 + $0xd8] sm:$0xff]
        %v339 = vld [vmem:[%s310 + $0xe0] sm:$0xff]
        %v340 = vld [vmem:[%s310 + $0xe8] sm:$0xff]
        %v341 = vld [vmem:[%s310 + $0xf0] sm:$0xff]
        %v342 = vld [vmem:[%s310 + $0xf8] sm:$0xff]
        %343 = vmatprep.subr.mxu0 0.0
        %344 = vmatpush1.xpose.msra.mxu0 %v326
        %345 = vmatprep.subr.mxu0 0.0
        %346 = vmatpush1.xpose.msra.mxu0 %v325
        %347 = vmatprep.subr.mxu0 0.0
        %348 = vmatpush1.xpose.msra.mxu0 %v324
        %349 = vmatprep.subr.mxu0 0.0
        %350 = vmatpush1.xpose.msra.mxu0 %v323
        %351 = vmatprep.subr.mxu0 0.0
        %352 = vmatpush1.xpose.msra.mxu0 %v322
        %353 = vmatprep.subr.mxu0 0.0
        %354 = vmatpush1.xpose.msra.mxu0 %v321
        %355 = vmatprep.subr.mxu0 0.0
        %356 = vmatpush1.xpose.msra.mxu0 %v320
        %357 = vmatprep.subr.mxu0 0.0
        %358 = vmatpush1.xpose.msra.mxu0 %v319
        %359 = vmatprep.subr.mxu0 0.0
        %360 = vmatpush1.xpose.msra.mxu0 %v318
        %361 = vmatprep.subr.mxu0 0.0
        %362 = vmatpush1.xpose.msra.mxu0 %v317
        %363 = vmatprep.subr.mxu0 0.0
        %364 = vmatpush1.xpose.msra.mxu0 %v316
        %365 = vmatprep.subr.mxu0 0.0
        %366 = vmatpush1.xpose.msra.mxu0 %v315
        %367 = vmatprep.subr.mxu0 0.0
        %368 = vmatpush1.xpose.msra.mxu0 %v314
        %369 = vmatprep.subr.mxu0 0.0
        %370 = vmatpush1.xpose.msra.mxu0 %v313
        %371 = vmatprep.subr.mxu0 0.0
        %372 = vmatpush1.xpose.msra.mxu0 %v312
        %373 = vmatprep.subr.mxu0 0.0
        %374 = vmatpush1.xpose.msra.mxu0 %v311
        %375 = vmatprep.subr.mxu0 0.0
        %376 = vmatpush2.xpose.msra.mxu0 %v342
        %377 = vmatprep.subr.mxu0 0.0
        %378 = vmatpush2.xpose.msra.mxu0 %v341
        %379 = vmatprep.subr.mxu0 0.0
        %380 = vmatpush2.xpose.msra.mxu0 %v340
        %381 = vmatprep.subr.mxu0 0.0
        %382 = vmatpush2.xpose.msra.mxu0 %v339
        %383 = vmatprep.subr.mxu0 0.0
        %384 = vmatpush2.xpose.msra.mxu0 %v338
        %385 = vmatprep.subr.mxu0 0.0
        %386 = vmatpush2.xpose.msra.mxu0 %v337
        %387 = vmatprep.subr.mxu0 0.0
        %388 = vmatpush2.xpose.msra.mxu0 %v336
        %389 = vmatprep.subr.mxu0 0.0
        %390 = vmatpush2.xpose.msra.mxu0 %v335
        %391 = vmatprep.subr.mxu0 0.0
        %392 = vmatpush2.xpose.msra.mxu0 %v334
        %393 = vmatprep.subr.mxu0 0.0
        %394 = vmatpush2.xpose.msra.mxu0 %v333
        %395 = vmatprep.subr.mxu0 0.0
        %396 = vmatpush2.xpose.msra.mxu0 %v332
        %397 = vmatprep.subr.mxu0 0.0
        %398 = vmatpush2.xpose.msra.mxu0 %v331
        %399 = vmatprep.subr.mxu0 0.0
        %400 = vmatpush2.xpose.msra.mxu0 %v330
        %401 = vmatprep.subr.mxu0 0.0
        %402 = vmatpush2.xpose.msra.mxu0 %v329
        %403 = vmatprep.subr.mxu0 0.0
        %404 = vmatpush2.xpose.msra.mxu0 %v328
        %405 = vmatprep.subr.mxu0 0.0
        %406 = vmatpush2.xpose.msra.mxu0 %v327
        %407 = vmatprep.mubr.f32.mxu0 0.0
        %408 = vmatmul.mubr.f32.gmra.mxu0 %v201
        %v409 = vpop.f32.mrf.mxu0
        %v410 = vadd.f32 0.0, %v409
        %v411 = vpop.f32.mrf.mxu0
        %v412 = vadd.f32 0.0, %v411
        %413 = vdwg.mxu0
        %vm414 = vcmp.eq.s32.totalorder %v203, 1
        %v415 = vsel %vm414, %v410, %v308
        %v416 = vsel %vm414, %v412, %v309
        %s417 = scalar_lea.vmem %s174, 512 [#allocation5]
        %v418 = vld [vmem:[%s417] sm:$0xff]
        %v419 = vld [vmem:[%s417 + $0x8] sm:$0xff]
        %v420 = vld [vmem:[%s417 + $0x10] sm:$0xff]
        %v421 = vld [vmem:[%s417 + $0x18] sm:$0xff]
        %v422 = vld [vmem:[%s417 + $0x20] sm:$0xff]
        %v423 = vld [vmem:[%s417 + $0x28] sm:$0xff]
        %v424 = vld [vmem:[%s417 + $0x30] sm:$0xff]
        %v425 = vld [vmem:[%s417 + $0x38] sm:$0xff]
        %v426 = vld [vmem:[%s417 + $0x40] sm:$0xff]
        %v427 = vld [vmem:[%s417 + $0x48] sm:$0xff]
        %v428 = vld [vmem:[%s417 + $0x50] sm:$0xff]
        %v429 = vld [vmem:[%s417 + $0x58] sm:$0xff]
        %v430 = vld [vmem:[%s417 + $0x60] sm:$0xff]
        %v431 = vld [vmem:[%s417 + $0x68] sm:$0xff]
        %v432 = vld [vmem:[%s417 + $0x70] sm:$0xff]
        %v433 = vld [vmem:[%s417 + $0x78] sm:$0xff]
        %v434 = vld [vmem:[%s417 + $0x80] sm:$0xff]
        %v435 = vld [vmem:[%s417 + $0x88] sm:$0xff]
        %v436 = vld [vmem:[%s417 + $0x90] sm:$0xff]
        %v437 = vld [vmem:[%s417 + $0x98] sm:$0xff]
        %v438 = vld [vmem:[%s417 + $0xa0] sm:$0xff]
        %v439 = vld [vmem:[%s417 + $0xa8] sm:$0xff]
        %v440 = vld [vmem:[%s417 + $0xb0] sm:$0xff]
        %v441 = vld [vmem:[%s417 + $0xb8] sm:$0xff]
        %v442 = vld [vmem:[%s417 + $0xc0] sm:$0xff]
        %v443 = vld [vmem:[%s417 + $0xc8] sm:$0xff]
        %v444 = vld [vmem:[%s417 + $0xd0] sm:$0xff]
        %v445 = vld [vmem:[%s417 + $0xd8] sm:$0xff]
        %v446 = vld [vmem:[%s417 + $0xe0] sm:$0xff]
        %v447 = vld [vmem:[%s417 + $0xe8] sm:$0xff]
        %v448 = vld [vmem:[%s417 + $0xf0] sm:$0xff]
        %v449 = vld [vmem:[%s417 + $0xf8] sm:$0xff]
        %450 = vmatprep.subr.mxu0 0.0
        %451 = vmatpush1.xpose.msra.mxu0 %v433
        %452 = vmatprep.subr.mxu0 0.0
        %453 = vmatpush1.xpose.msra.mxu0 %v432
        %454 = vmatprep.subr.mxu0 0.0
        %455 = vmatpush1.xpose.msra.mxu0 %v431
        %456 = vmatprep.subr.mxu0 0.0
        %457 = vmatpush1.xpose.msra.mxu0 %v430
        %458 = vmatprep.subr.mxu0 0.0
        %459 = vmatpush1.xpose.msra.mxu0 %v429
        %460 = vmatprep.subr.mxu0 0.0
        %461 = vmatpush1.xpose.msra.mxu0 %v428
        %462 = vmatprep.subr.mxu0 0.0
        %463 = vmatpush1.xpose.msra.mxu0 %v427
        %464 = vmatprep.subr.mxu0 0.0
        %465 = vmatpush1.xpose.msra.mxu0 %v426
        %466 = vmatprep.subr.mxu0 0.0
        %467 = vmatpush1.xpose.msra.mxu0 %v425
        %468 = vmatprep.subr.mxu0 0.0
        %469 = vmatpush1.xpose.msra.mxu0 %v424
        %470 = vmatprep.subr.mxu0 0.0
        %471 = vmatpush1.xpose.msra.mxu0 %v423
        %472 = vmatprep.subr.mxu0 0.0
        %473 = vmatpush1.xpose.msra.mxu0 %v422
        %474 = vmatprep.subr.mxu0 0.0
        %475 = vmatpush1.xpose.msra.mxu0 %v421
        %476 = vmatprep.subr.mxu0 0.0
        %477 = vmatpush1.xpose.msra.mxu0 %v420
        %478 = vmatprep.subr.mxu0 0.0
        %479 = vmatpush1.xpose.msra.mxu0 %v419
        %480 = vmatprep.subr.mxu0 0.0
        %481 = vmatpush1.xpose.msra.mxu0 %v418
        %482 = vmatprep.subr.mxu0 0.0
        %483 = vmatpush2.xpose.msra.mxu0 %v449
        %484 = vmatprep.subr.mxu0 0.0
        %485 = vmatpush2.xpose.msra.mxu0 %v448
        %486 = vmatprep.subr.mxu0 0.0
        %487 = vmatpush2.xpose.msra.mxu0 %v447
        %488 = vmatprep.subr.mxu0 0.0
        %489 = vmatpush2.xpose.msra.mxu0 %v446
        %490 = vmatprep.subr.mxu0 0.0
        %491 = vmatpush2.xpose.msra.mxu0 %v445
        %492 = vmatprep.subr.mxu0 0.0
        %493 = vmatpush2.xpose.msra.mxu0 %v444
        %494 = vmatprep.subr.mxu0 0.0
        %495 = vmatpush2.xpose.msra.mxu0 %v443
        %496 = vmatprep.subr.mxu0 0.0
        %497 = vmatpush2.xpose.msra.mxu0 %v442
        %498 = vmatprep.subr.mxu0 0.0
        %499 = vmatpush2.xpose.msra.mxu0 %v441
        %500 = vmatprep.subr.mxu0 0.0
        %501 = vmatpush2.xpose.msra.mxu0 %v440
        %502 = vmatprep.subr.mxu0 0.0
        %503 = vmatpush2.xpose.msra.mxu0 %v439
        %504 = vmatprep.subr.mxu0 0.0
        %505 = vmatpush2.xpose.msra.mxu0 %v438
        %506 = vmatprep.subr.mxu0 0.0
        %507 = vmatpush2.xpose.msra.mxu0 %v437
        %508 = vmatprep.subr.mxu0 0.0
        %509 = vmatpush2.xpose.msra.mxu0 %v436
        %510 = vmatprep.subr.mxu0 0.0
        %511 = vmatpush2.xpose.msra.mxu0 %v435
        %512 = vmatprep.subr.mxu0 0.0
        %513 = vmatpush2.xpose.msra.mxu0 %v434
        %514 = vmatprep.mubr.f32.mxu0 0.0
        %515 = vmatmul.mubr.f32.gmra.mxu0 %v201
        %v516 = vpop.f32.mrf.mxu0
        %v517 = vadd.f32 0.0, %v516
        %v518 = vpop.f32.mrf.mxu0
        %v519 = vadd.f32 0.0, %v518
        %520 = vdwg.mxu0
        %vm521 = vcmp.eq.s32.totalorder %v203, 2
        %v522 = vsel %vm521, %v517, %v415
        %v523 = vsel %vm521, %v519, %v416
        %s524 = scalar_lea.vmem %s174, 768 [#allocation5]
        %v525 = vld [vmem:[%s524] sm:$0xff]
        %v526 = vld [vmem:[%s524 + $0x8] sm:$0xff]
        %v527 = vld [vmem:[%s524 + $0x10] sm:$0xff]
        %v528 = vld [vmem:[%s524 + $0x18] sm:$0xff]
        %v529 = vld [vmem:[%s524 + $0x20] sm:$0xff]
        %v530 = vld [vmem:[%s524 + $0x28] sm:$0xff]
        %v531 = vld [vmem:[%s524 + $0x30] sm:$0xff]
        %v532 = vld [vmem:[%s524 + $0x38] sm:$0xff]
        %v533 = vld [vmem:[%s524 + $0x40] sm:$0xff]
        %v534 = vld [vmem:[%s524 + $0x48] sm:$0xff]
        %v535 = vld [vmem:[%s524 + $0x50] sm:$0xff]
        %v536 = vld [vmem:[%s524 + $0x58] sm:$0xff]
        %v537 = vld [vmem:[%s524 + $0x60] sm:$0xff]
        %v538 = vld [vmem:[%s524 + $0x68] sm:$0xff]
        %v539 = vld [vmem:[%s524 + $0x70] sm:$0xff]
        %v540 = vld [vmem:[%s524 + $0x78] sm:$0xff]
        %v541 = vld [vmem:[%s524 + $0x80] sm:$0xff]
        %v542 = vld [vmem:[%s524 + $0x88] sm:$0xff]
        %v543 = vld [vmem:[%s524 + $0x90] sm:$0xff]
        %v544 = vld [vmem:[%s524 + $0x98] sm:$0xff]
        %v545 = vld [vmem:[%s524 + $0xa0] sm:$0xff]
        %v546 = vld [vmem:[%s524 + $0xa8] sm:$0xff]
        %v547 = vld [vmem:[%s524 + $0xb0] sm:$0xff]
        %v548 = vld [vmem:[%s524 + $0xb8] sm:$0xff]
        %v549 = vld [vmem:[%s524 + $0xc0] sm:$0xff]
        %v550 = vld [vmem:[%s524 + $0xc8] sm:$0xff]
        %v551 = vld [vmem:[%s524 + $0xd0] sm:$0xff]
        %v552 = vld [vmem:[%s524 + $0xd8] sm:$0xff]
        %v553 = vld [vmem:[%s524 + $0xe0] sm:$0xff]
        %v554 = vld [vmem:[%s524 + $0xe8] sm:$0xff]
        %v555 = vld [vmem:[%s524 + $0xf0] sm:$0xff]
        %v556 = vld [vmem:[%s524 + $0xf8] sm:$0xff]
        %557 = vmatprep.subr.mxu0 0.0
        %558 = vmatpush1.xpose.msra.mxu0 %v540
        %559 = vmatprep.subr.mxu0 0.0
        %560 = vmatpush1.xpose.msra.mxu0 %v539
        %561 = vmatprep.subr.mxu0 0.0
        %562 = vmatpush1.xpose.msra.mxu0 %v538
        %563 = vmatprep.subr.mxu0 0.0
        %564 = vmatpush1.xpose.msra.mxu0 %v537
        %565 = vmatprep.subr.mxu0 0.0
        %566 = vmatpush1.xpose.msra.mxu0 %v536
        %567 = vmatprep.subr.mxu0 0.0
        %568 = vmatpush1.xpose.msra.mxu0 %v535
        %569 = vmatprep.subr.mxu0 0.0
        %570 = vmatpush1.xpose.msra.mxu0 %v534
        %571 = vmatprep.subr.mxu0 0.0
        %572 = vmatpush1.xpose.msra.mxu0 %v533
        %573 = vmatprep.subr.mxu0 0.0
        %574 = vmatpush1.xpose.msra.mxu0 %v532
        %575 = vmatprep.subr.mxu0 0.0
        %576 = vmatpush1.xpose.msra.mxu0 %v531
        %577 = vmatprep.subr.mxu0 0.0
        %578 = vmatpush1.xpose.msra.mxu0 %v530
        %579 = vmatprep.subr.mxu0 0.0
        %580 = vmatpush1.xpose.msra.mxu0 %v529
        %581 = vmatprep.subr.mxu0 0.0
        %582 = vmatpush1.xpose.msra.mxu0 %v528
        %583 = vmatprep.subr.mxu0 0.0
        %584 = vmatpush1.xpose.msra.mxu0 %v527
        %585 = vmatprep.subr.mxu0 0.0
        %586 = vmatpush1.xpose.msra.mxu0 %v526
        %587 = vmatprep.subr.mxu0 0.0
        %588 = vmatpush1.xpose.msra.mxu0 %v525
        %589 = vmatprep.subr.mxu0 0.0
        %590 = vmatpush2.xpose.msra.mxu0 %v556
        %591 = vmatprep.subr.mxu0 0.0
        %592 = vmatpush2.xpose.msra.mxu0 %v555
        %593 = vmatprep.subr.mxu0 0.0
        %594 = vmatpush2.xpose.msra.mxu0 %v554
        %595 = vmatprep.subr.mxu0 0.0
        %596 = vmatpush2.xpose.msra.mxu0 %v553
        %597 = vmatprep.subr.mxu0 0.0
        %598 = vmatpush2.xpose.msra.mxu0 %v552
        %599 = vmatprep.subr.mxu0 0.0
        %600 = vmatpush2.xpose.msra.mxu0 %v551
        %601 = vmatprep.subr.mxu0 0.0
        %602 = vmatpush2.xpose.msra.mxu0 %v550
        %603 = vmatprep.subr.mxu0 0.0
        %604 = vmatpush2.xpose.msra.mxu0 %v549
        %605 = vmatprep.subr.mxu0 0.0
        %606 = vmatpush2.xpose.msra.mxu0 %v548
        %607 = vmatprep.subr.mxu0 0.0
        %608 = vmatpush2.xpose.msra.mxu0 %v547
        %609 = vmatprep.subr.mxu0 0.0
        %610 = vmatpush2.xpose.msra.mxu0 %v546
        %611 = vmatprep.subr.mxu0 0.0
        %612 = vmatpush2.xpose.msra.mxu0 %v545
        %613 = vmatprep.subr.mxu0 0.0
        %614 = vmatpush2.xpose.msra.mxu0 %v544
        %615 = vmatprep.subr.mxu0 0.0
        %616 = vmatpush2.xpose.msra.mxu0 %v543
        %617 = vmatprep.subr.mxu0 0.0
        %618 = vmatpush2.xpose.msra.mxu0 %v542
        %619 = vmatprep.subr.mxu0 0.0
        %620 = vmatpush2.xpose.msra.mxu0 %v541
        %621 = vmatprep.mubr.f32.mxu0 0.0
        %622 = vmatmul.mubr.f32.gmra.mxu0 %v201
        %v623 = vpop.f32.mrf.mxu0
        %v624 = vadd.f32 0.0, %v623
        %v625 = vpop.f32.mrf.mxu0
        %v626 = vadd.f32 0.0, %v625
        %627 = vdwg.mxu0
        %vm628 = vcmp.eq.s32.totalorder %v203, 3
        %v629 = vsel %vm628, %v624, %v522
        %v630 = vsel %vm628, %v626, %v523
        %s631 = scalar_lea.vmem %s174, 1024 [#allocation5]
        %v632 = vld [vmem:[%s631] sm:$0xff]
        %v633 = vld [vmem:[%s631 + $0x8] sm:$0xff]
        %v634 = vld [vmem:[%s631 + $0x10] sm:$0xff]
        %v635 = vld [vmem:[%s631 + $0x18] sm:$0xff]
        %v636 = vld [vmem:[%s631 + $0x20] sm:$0xff]
        %v637 = vld [vmem:[%s631 + $0x28] sm:$0xff]
        %v638 = vld [vmem:[%s631 + $0x30] sm:$0xff]
        %v639 = vld [vmem:[%s631 + $0x38] sm:$0xff]
        %v640 = vld [vmem:[%s631 + $0x40] sm:$0xff]
        %v641 = vld [vmem:[%s631 + $0x48] sm:$0xff]
        %v642 = vld [vmem:[%s631 + $0x50] sm:$0xff]
        %v643 = vld [vmem:[%s631 + $0x58] sm:$0xff]
        %v644 = vld [vmem:[%s631 + $0x60] sm:$0xff]
        %v645 = vld [vmem:[%s631 + $0x68] sm:$0xff]
        %v646 = vld [vmem:[%s631 + $0x70] sm:$0xff]
        %v647 = vld [vmem:[%s631 + $0x78] sm:$0xff]
        %v648 = vld [vmem:[%s631 + $0x80] sm:$0xff]
        %v649 = vld [vmem:[%s631 + $0x88] sm:$0xff]
        %v650 = vld [vmem:[%s631 + $0x90] sm:$0xff]
        %v651 = vld [vmem:[%s631 + $0x98] sm:$0xff]
        %v652 = vld [vmem:[%s631 + $0xa0] sm:$0xff]
        %v653 = vld [vmem:[%s631 + $0xa8] sm:$0xff]
        %v654 = vld [vmem:[%s631 + $0xb0] sm:$0xff]
        %v655 = vld [vmem:[%s631 + $0xb8] sm:$0xff]
        %v656 = vld [vmem:[%s631 + $0xc0] sm:$0xff]
        %v657 = vld [vmem:[%s631 + $0xc8] sm:$0xff]
        %v658 = vld [vmem:[%s631 + $0xd0] sm:$0xff]
        %v659 = vld [vmem:[%s631 + $0xd8] sm:$0xff]
        %v660 = vld [vmem:[%s631 + $0xe0] sm:$0xff]
        %v661 = vld [vmem:[%s631 + $0xe8] sm:$0xff]
        %v662 = vld [vmem:[%s631 + $0xf0] sm:$0xff]
        %v663 = vld [vmem:[%s631 + $0xf8] sm:$0xff]
        %664 = vmatprep.subr.mxu0 0.0
        %665 = vmatpush1.xpose.msra.mxu0 %v647
        %666 = vmatprep.subr.mxu0 0.0
        %667 = vmatpush1.xpose.msra.mxu0 %v646
        %668 = vmatprep.subr.mxu0 0.0
        %669 = vmatpush1.xpose.msra.mxu0 %v645
        %670 = vmatprep.subr.mxu0 0.0
        %671 = vmatpush1.xpose.msra.mxu0 %v644
        %672 = vmatprep.subr.mxu0 0.0
        %673 = vmatpush1.xpose.msra.mxu0 %v643
        %674 = vmatprep.subr.mxu0 0.0
        %675 = vmatpush1.xpose.msra.mxu0 %v642
        %676 = vmatprep.subr.mxu0 0.0
        %677 = vmatpush1.xpose.msra.mxu0 %v641
        %678 = vmatprep.subr.mxu0 0.0
        %679 = vmatpush1.xpose.msra.mxu0 %v640
        %680 = vmatprep.subr.mxu0 0.0
        %681 = vmatpush1.xpose.msra.mxu0 %v639
        %682 = vmatprep.subr.mxu0 0.0
        %683 = vmatpush1.xpose.msra.mxu0 %v638
        %684 = vmatprep.subr.mxu0 0.0
        %685 = vmatpush1.xpose.msra.mxu0 %v637
        %686 = vmatprep.subr.mxu0 0.0
        %687 = vmatpush1.xpose.msra.mxu0 %v636
        %688 = vmatprep.subr.mxu0 0.0
        %689 = vmatpush1.xpose.msra.mxu0 %v635
        %690 = vmatprep.subr.mxu0 0.0
        %691 = vmatpush1.xpose.msra.mxu0 %v634
        %692 = vmatprep.subr.mxu0 0.0
        %693 = vmatpush1.xpose.msra.mxu0 %v633
        %694 = vmatprep.subr.mxu0 0.0
        %695 = vmatpush1.xpose.msra.mxu0 %v632
        %696 = vmatprep.subr.mxu0 0.0
        %697 = vmatpush2.xpose.msra.mxu0 %v663
        %698 = vmatprep.subr.mxu0 0.0
        %699 = vmatpush2.xpose.msra.mxu0 %v662
        %700 = vmatprep.subr.mxu0 0.0
        %701 = vmatpush2.xpose.msra.mxu0 %v661
        %702 = vmatprep.subr.mxu0 0.0
        %703 = vmatpush2.xpose.msra.mxu0 %v660
        %704 = vmatprep.subr.mxu0 0.0
        %705 = vmatpush2.xpose.msra.mxu0 %v659
        %706 = vmatprep.subr.mxu0 0.0
        %707 = vmatpush2.xpose.msra.mxu0 %v658
        %708 = vmatprep.subr.mxu0 0.0
        %709 = vmatpush2.xpose.msra.mxu0 %v657
        %710 = vmatprep.subr.mxu0 0.0
        %711 = vmatpush2.xpose.msra.mxu0 %v656
        %712 = vmatprep.subr.mxu0 0.0
        %713 = vmatpush2.xpose.msra.mxu0 %v655
        %714 = vmatprep.subr.mxu0 0.0
        %715 = vmatpush2.xpose.msra.mxu0 %v654
        %716 = vmatprep.subr.mxu0 0.0
        %717 = vmatpush2.xpose.msra.mxu0 %v653
        %718 = vmatprep.subr.mxu0 0.0
        %719 = vmatpush2.xpose.msra.mxu0 %v652
        %720 = vmatprep.subr.mxu0 0.0
        %721 = vmatpush2.xpose.msra.mxu0 %v651
        %722 = vmatprep.subr.mxu0 0.0
        %723 = vmatpush2.xpose.msra.mxu0 %v650
        %724 = vmatprep.subr.mxu0 0.0
        %725 = vmatpush2.xpose.msra.mxu0 %v649
        %726 = vmatprep.subr.mxu0 0.0
        %727 = vmatpush2.xpose.msra.mxu0 %v648
        %728 = vmatprep.mubr.f32.mxu0 0.0
        %729 = vmatmul.mubr.f32.gmra.mxu0 %v201
        %v730 = vpop.f32.mrf.mxu0
        %v731 = vadd.f32 0.0, %v730
        %v732 = vpop.f32.mrf.mxu0
        %v733 = vadd.f32 0.0, %v732
        %734 = vdwg.mxu0
        %vm735 = vcmp.eq.s32.totalorder %v203, 4
        %v736 = vsel %vm735, %v731, %v629
        %v737 = vsel %vm735, %v733, %v630
        %s738 = scalar_lea.vmem %s174, 1280 [#allocation5]
        %v739 = vld [vmem:[%s738] sm:$0xff]
        %v740 = vld [vmem:[%s738 + $0x8] sm:$0xff]
        %v741 = vld [vmem:[%s738 + $0x10] sm:$0xff]
        %v742 = vld [vmem:[%s738 + $0x18] sm:$0xff]
        %v743 = vld [vmem:[%s738 + $0x20] sm:$0xff]
        %v744 = vld [vmem:[%s738 + $0x28] sm:$0xff]
        %v745 = vld [vmem:[%s738 + $0x30] sm:$0xff]
        %v746 = vld [vmem:[%s738 + $0x38] sm:$0xff]
        %v747 = vld [vmem:[%s738 + $0x40] sm:$0xff]
        %v748 = vld [vmem:[%s738 + $0x48] sm:$0xff]
        %v749 = vld [vmem:[%s738 + $0x50] sm:$0xff]
        %v750 = vld [vmem:[%s738 + $0x58] sm:$0xff]
        %v751 = vld [vmem:[%s738 + $0x60] sm:$0xff]
        %v752 = vld [vmem:[%s738 + $0x68] sm:$0xff]
        %v753 = vld [vmem:[%s738 + $0x70] sm:$0xff]
        %v754 = vld [vmem:[%s738 + $0x78] sm:$0xff]
        %v755 = vld [vmem:[%s738 + $0x80] sm:$0xff]
        %v756 = vld [vmem:[%s738 + $0x88] sm:$0xff]
        %v757 = vld [vmem:[%s738 + $0x90] sm:$0xff]
        %v758 = vld [vmem:[%s738 + $0x98] sm:$0xff]
        %v759 = vld [vmem:[%s738 + $0xa0] sm:$0xff]
        %v760 = vld [vmem:[%s738 + $0xa8] sm:$0xff]
        %v761 = vld [vmem:[%s738 + $0xb0] sm:$0xff]
        %v762 = vld [vmem:[%s738 + $0xb8] sm:$0xff]
        %v763 = vld [vmem:[%s738 + $0xc0] sm:$0xff]
        %v764 = vld [vmem:[%s738 + $0xc8] sm:$0xff]
        %v765 = vld [vmem:[%s738 + $0xd0] sm:$0xff]
        %v766 = vld [vmem:[%s738 + $0xd8] sm:$0xff]
        %v767 = vld [vmem:[%s738 + $0xe0] sm:$0xff]
        %v768 = vld [vmem:[%s738 + $0xe8] sm:$0xff]
        %v769 = vld [vmem:[%s738 + $0xf0] sm:$0xff]
        %v770 = vld [vmem:[%s738 + $0xf8] sm:$0xff]
        %771 = vmatprep.subr.mxu0 0.0
        %772 = vmatpush1.xpose.msra.mxu0 %v754
        %773 = vmatprep.subr.mxu0 0.0
        %774 = vmatpush1.xpose.msra.mxu0 %v753
        %775 = vmatprep.subr.mxu0 0.0
        %776 = vmatpush1.xpose.msra.mxu0 %v752
        %777 = vmatprep.subr.mxu0 0.0
        %778 = vmatpush1.xpose.msra.mxu0 %v751
        %779 = vmatprep.subr.mxu0 0.0
        %780 = vmatpush1.xpose.msra.mxu0 %v750
        %781 = vmatprep.subr.mxu0 0.0
        %782 = vmatpush1.xpose.msra.mxu0 %v749
        %783 = vmatprep.subr.mxu0 0.0
        %784 = vmatpush1.xpose.msra.mxu0 %v748
        %785 = vmatprep.subr.mxu0 0.0
        %786 = vmatpush1.xpose.msra.mxu0 %v747
        %787 = vmatprep.subr.mxu0 0.0
        %788 = vmatpush1.xpose.msra.mxu0 %v746
        %789 = vmatprep.subr.mxu0 0.0
        %790 = vmatpush1.xpose.msra.mxu0 %v745
        %791 = vmatprep.subr.mxu0 0.0
        %792 = vmatpush1.xpose.msra.mxu0 %v744
        %793 = vmatprep.subr.mxu0 0.0
        %794 = vmatpush1.xpose.msra.mxu0 %v743
        %795 = vmatprep.subr.mxu0 0.0
        %796 = vmatpush1.xpose.msra.mxu0 %v742
        %797 = vmatprep.subr.mxu0 0.0
        %798 = vmatpush1.xpose.msra.mxu0 %v741
        %799 = vmatprep.subr.mxu0 0.0
        %800 = vmatpush1.xpose.msra.mxu0 %v740
        %801 = vmatprep.subr.mxu0 0.0
        %802 = vmatpush1.xpose.msra.mxu0 %v739
        %803 = vmatprep.subr.mxu0 0.0
        %804 = vmatpush2.xpose.msra.mxu0 %v770
        %805 = vmatprep.subr.mxu0 0.0
        %806 = vmatpush2.xpose.msra.mxu0 %v769
        %807 = vmatprep.subr.mxu0 0.0
        %808 = vmatpush2.xpose.msra.mxu0 %v768
        %809 = vmatprep.subr.mxu0 0.0
        %810 = vmatpush2.xpose.msra.mxu0 %v767
        %811 = vmatprep.subr.mxu0 0.0
        %812 = vmatpush2.xpose.msra.mxu0 %v766
        %813 = vmatprep.subr.mxu0 0.0
        %814 = vmatpush2.xpose.msra.mxu0 %v765
        %815 = vmatprep.subr.mxu0 0.0
        %816 = vmatpush2.xpose.msra.mxu0 %v764
        %817 = vmatprep.subr.mxu0 0.0
        %818 = vmatpush2.xpose.msra.mxu0 %v763
        %819 = vmatprep.subr.mxu0 0.0
        %820 = vmatpush2.xpose.msra.mxu0 %v762
        %821 = vmatprep.subr.mxu0 0.0
        %822 = vmatpush2.xpose.msra.mxu0 %v761
        %823 = vmatprep.subr.mxu0 0.0
        %824 = vmatpush2.xpose.msra.mxu0 %v760
        %825 = vmatprep.subr.mxu0 0.0
        %826 = vmatpush2.xpose.msra.mxu0 %v759
        %827 = vmatprep.subr.mxu0 0.0
        %828 = vmatpush2.xpose.msra.mxu0 %v758
        %829 = vmatprep.subr.mxu0 0.0
        %830 = vmatpush2.xpose.msra.mxu0 %v757
        %831 = vmatprep.subr.mxu0 0.0
        %832 = vmatpush2.xpose.msra.mxu0 %v756
        %833 = vmatprep.subr.mxu0 0.0
        %834 = vmatpush2.xpose.msra.mxu0 %v755
        %835 = vmatprep.mubr.f32.mxu0 0.0
        %836 = vmatmul.mubr.f32.gmra.mxu0 %v201
        %v837 = vpop.f32.mrf.mxu0
        %v838 = vadd.f32 0.0, %v837
        %v839 = vpop.f32.mrf.mxu0
        %v840 = vadd.f32 0.0, %v839
        %841 = vdwg.mxu0
        %vm842 = vcmp.eq.s32.totalorder %v203, 5
        %v843 = vsel %vm842, %v838, %v736
        %v844 = vsel %vm842, %v840, %v737
        %s845 = scalar_lea.vmem %s174, 1536 [#allocation5]
        %v846 = vld [vmem:[%s845] sm:$0xff]
        %v847 = vld [vmem:[%s845 + $0x8] sm:$0xff]
        %v848 = vld [vmem:[%s845 + $0x10] sm:$0xff]
        %v849 = vld [vmem:[%s845 + $0x18] sm:$0xff]
        %v850 = vld [vmem:[%s845 + $0x20] sm:$0xff]
        %v851 = vld [vmem:[%s845 + $0x28] sm:$0xff]
        %v852 = vld [vmem:[%s845 + $0x30] sm:$0xff]
        %v853 = vld [vmem:[%s845 + $0x38] sm:$0xff]
        %v854 = vld [vmem:[%s845 + $0x40] sm:$0xff]
        %v855 = vld [vmem:[%s845 + $0x48] sm:$0xff]
        %v856 = vld [vmem:[%s845 + $0x50] sm:$0xff]
        %v857 = vld [vmem:[%s845 + $0x58] sm:$0xff]
        %v858 = vld [vmem:[%s845 + $0x60] sm:$0xff]
        %v859 = vld [vmem:[%s845 + $0x68] sm:$0xff]
        %v860 = vld [vmem:[%s845 + $0x70] sm:$0xff]
        %v861 = vld [vmem:[%s845 + $0x78] sm:$0xff]
        %v862 = vld [vmem:[%s845 + $0x80] sm:$0xff]
        %v863 = vld [vmem:[%s845 + $0x88] sm:$0xff]
        %v864 = vld [vmem:[%s845 + $0x90] sm:$0xff]
        %v865 = vld [vmem:[%s845 + $0x98] sm:$0xff]
        %v866 = vld [vmem:[%s845 + $0xa0] sm:$0xff]
        %v867 = vld [vmem:[%s845 + $0xa8] sm:$0xff]
        %v868 = vld [vmem:[%s845 + $0xb0] sm:$0xff]
        %v869 = vld [vmem:[%s845 + $0xb8] sm:$0xff]
        %v870 = vld [vmem:[%s845 + $0xc0] sm:$0xff]
        %v871 = vld [vmem:[%s845 + $0xc8] sm:$0xff]
        %v872 = vld [vmem:[%s845 + $0xd0] sm:$0xff]
        %v873 = vld [vmem:[%s845 + $0xd8] sm:$0xff]
        %v874 = vld [vmem:[%s845 + $0xe0] sm:$0xff]
        %v875 = vld [vmem:[%s845 + $0xe8] sm:$0xff]
        %v876 = vld [vmem:[%s845 + $0xf0] sm:$0xff]
        %v877 = vld [vmem:[%s845 + $0xf8] sm:$0xff]
        %878 = vmatprep.subr.mxu0 0.0
        %879 = vmatpush1.xpose.msra.mxu0 %v861
        %880 = vmatprep.subr.mxu0 0.0
        %881 = vmatpush1.xpose.msra.mxu0 %v860
        %882 = vmatprep.subr.mxu0 0.0
        %883 = vmatpush1.xpose.msra.mxu0 %v859
        %884 = vmatprep.subr.mxu0 0.0
        %885 = vmatpush1.xpose.msra.mxu0 %v858
        %886 = vmatprep.subr.mxu0 0.0
        %887 = vmatpush1.xpose.msra.mxu0 %v857
        %888 = vmatprep.subr.mxu0 0.0
        %889 = vmatpush1.xpose.msra.mxu0 %v856
        %890 = vmatprep.subr.mxu0 0.0
        %891 = vmatpush1.xpose.msra.mxu0 %v855
        %892 = vmatprep.subr.mxu0 0.0
        %893 = vmatpush1.xpose.msra.mxu0 %v854
        %894 = vmatprep.subr.mxu0 0.0
        %895 = vmatpush1.xpose.msra.mxu0 %v853
        %896 = vmatprep.subr.mxu0 0.0
        %897 = vmatpush1.xpose.msra.mxu0 %v852
        %898 = vmatprep.subr.mxu0 0.0
        %899 = vmatpush1.xpose.msra.mxu0 %v851
        %900 = vmatprep.subr.mxu0 0.0
        %901 = vmatpush1.xpose.msra.mxu0 %v850
        %902 = vmatprep.subr.mxu0 0.0
        %903 = vmatpush1.xpose.msra.mxu0 %v849
        %904 = vmatprep.subr.mxu0 0.0
        %905 = vmatpush1.xpose.msra.mxu0 %v848
        %906 = vmatprep.subr.mxu0 0.0
        %907 = vmatpush1.xpose.msra.mxu0 %v847
        %908 = vmatprep.subr.mxu0 0.0
        %909 = vmatpush1.xpose.msra.mxu0 %v846
        %910 = vmatprep.subr.mxu0 0.0
        %911 = vmatpush2.xpose.msra.mxu0 %v877
        %912 = vmatprep.subr.mxu0 0.0
        %913 = vmatpush2.xpose.msra.mxu0 %v876
        %914 = vmatprep.subr.mxu0 0.0
        %915 = vmatpush2.xpose.msra.mxu0 %v875
        %916 = vmatprep.subr.mxu0 0.0
        %917 = vmatpush2.xpose.msra.mxu0 %v874
        %918 = vmatprep.subr.mxu0 0.0
        %919 = vmatpush2.xpose.msra.mxu0 %v873
        %920 = vmatprep.subr.mxu0 0.0
        %921 = vmatpush2.xpose.msra.mxu0 %v872
        %922 = vmatprep.subr.mxu0 0.0
        %923 = vmatpush2.xpose.msra.mxu0 %v871
        %924 = vmatprep.subr.mxu0 0.0
        %925 = vmatpush2.xpose.msra.mxu0 %v870
        %926 = vmatprep.subr.mxu0 0.0
        %927 = vmatpush2.xpose.msra.mxu0 %v869
        %928 = vmatprep.subr.mxu0 0.0
        %929 = vmatpush2.xpose.msra.mxu0 %v868
        %930 = vmatprep.subr.mxu0 0.0
        %931 = vmatpush2.xpose.msra.mxu0 %v867
        %932 = vmatprep.subr.mxu0 0.0
        %933 = vmatpush2.xpose.msra.mxu0 %v866
        %934 = vmatprep.subr.mxu0 0.0
        %935 = vmatpush2.xpose.msra.mxu0 %v865
        %936 = vmatprep.subr.mxu0 0.0
        %937 = vmatpush2.xpose.msra.mxu0 %v864
        %938 = vmatprep.subr.mxu0 0.0
        %939 = vmatpush2.xpose.msra.mxu0 %v863
        %940 = vmatprep.subr.mxu0 0.0
        %941 = vmatpush2.xpose.msra.mxu0 %v862
        %942 = vmatprep.mubr.f32.mxu0 0.0
        %943 = vmatmul.mubr.f32.gmra.mxu0 %v201
        %v944 = vpop.f32.mrf.mxu0
        %v945 = vadd.f32 0.0, %v944
        %v946 = vpop.f32.mrf.mxu0
        %v947 = vadd.f32 0.0, %v946
        %948 = vdwg.mxu0
        %vm949 = vcmp.eq.s32.totalorder %v203, 6
        %v950 = vsel %vm949, %v945, %v843
        %v951 = vsel %vm949, %v947, %v844
        %s952 = scalar_lea.vmem %s174, 1792 [#allocation5]
        %v953 = vld [vmem:[%s952] sm:$0xff]
        %v954 = vld [vmem:[%s952 + $0x8] sm:$0xff]
        %v955 = vld [vmem:[%s952 + $0x10] sm:$0xff]
        %v956 = vld [vmem:[%s952 + $0x18] sm:$0xff]
        %v957 = vld [vmem:[%s952 + $0x20] sm:$0xff]
        %v958 = vld [vmem:[%s952 + $0x28] sm:$0xff]
        %v959 = vld [vmem:[%s952 + $0x30] sm:$0xff]
        %v960 = vld [vmem:[%s952 + $0x38] sm:$0xff]
        %v961 = vld [vmem:[%s952 + $0x40] sm:$0xff]
        %v962 = vld [vmem:[%s952 + $0x48] sm:$0xff]
        %v963 = vld [vmem:[%s952 + $0x50] sm:$0xff]
        %v964 = vld [vmem:[%s952 + $0x58] sm:$0xff]
        %v965 = vld [vmem:[%s952 + $0x60] sm:$0xff]
        %v966 = vld [vmem:[%s952 + $0x68] sm:$0xff]
        %v967 = vld [vmem:[%s952 + $0x70] sm:$0xff]
        %v968 = vld [vmem:[%s952 + $0x78] sm:$0xff]
        %v969 = vld [vmem:[%s952 + $0x80] sm:$0xff]
        %v970 = vld [vmem:[%s952 + $0x88] sm:$0xff]
        %v971 = vld [vmem:[%s952 + $0x90] sm:$0xff]
        %v972 = vld [vmem:[%s952 + $0x98] sm:$0xff]
        %v973 = vld [vmem:[%s952 + $0xa0] sm:$0xff]
        %v974 = vld [vmem:[%s952 + $0xa8] sm:$0xff]
        %v975 = vld [vmem:[%s952 + $0xb0] sm:$0xff]
        %v976 = vld [vmem:[%s952 + $0xb8] sm:$0xff]
        %v977 = vld [vmem:[%s952 + $0xc0] sm:$0xff]
        %v978 = vld [vmem:[%s952 + $0xc8] sm:$0xff]
        %v979 = vld [vmem:[%s952 + $0xd0] sm:$0xff]
        %v980 = vld [vmem:[%s952 + $0xd8] sm:$0xff]
        %v981 = vld [vmem:[%s952 + $0xe0] sm:$0xff]
        %v982 = vld [vmem:[%s952 + $0xe8] sm:$0xff]
        %v983 = vld [vmem:[%s952 + $0xf0] sm:$0xff]
        %v984 = vld [vmem:[%s952 + $0xf8] sm:$0xff]
        %985 = vmatprep.subr.mxu0 0.0
        %986 = vmatpush1.xpose.msra.mxu0 %v968
        %987 = vmatprep.subr.mxu0 0.0
        %988 = vmatpush1.xpose.msra.mxu0 %v967
        %989 = vmatprep.subr.mxu0 0.0
        %990 = vmatpush1.xpose.msra.mxu0 %v966
        %991 = vmatprep.subr.mxu0 0.0
        %992 = vmatpush1.xpose.msra.mxu0 %v965
        %993 = vmatprep.subr.mxu0 0.0
        %994 = vmatpush1.xpose.msra.mxu0 %v964
        %995 = vmatprep.subr.mxu0 0.0
        %996 = vmatpush1.xpose.msra.mxu0 %v963
        %997 = vmatprep.subr.mxu0 0.0
        %998 = vmatpush1.xpose.msra.mxu0 %v962
        %999 = vmatprep.subr.mxu0 0.0
        %1000 = vmatpush1.xpose.msra.mxu0 %v961
        %1001 = vmatprep.subr.mxu0 0.0
        %1002 = vmatpush1.xpose.msra.mxu0 %v960
        %1003 = vmatprep.subr.mxu0 0.0
        %1004 = vmatpush1.xpose.msra.mxu0 %v959
        %1005 = vmatprep.subr.mxu0 0.0
        %1006 = vmatpush1.xpose.msra.mxu0 %v958
        %1007 = vmatprep.subr.mxu0 0.0
        %1008 = vmatpush1.xpose.msra.mxu0 %v957
        %1009 = vmatprep.subr.mxu0 0.0
        %1010 = vmatpush1.xpose.msra.mxu0 %v956
        %1011 = vmatprep.subr.mxu0 0.0
        %1012 = vmatpush1.xpose.msra.mxu0 %v955
        %1013 = vmatprep.subr.mxu0 0.0
        %1014 = vmatpush1.xpose.msra.mxu0 %v954
        %1015 = vmatprep.subr.mxu0 0.0
        %1016 = vmatpush1.xpose.msra.mxu0 %v953
        %1017 = vmatprep.subr.mxu0 0.0
        %1018 = vmatpush2.xpose.msra.mxu0 %v984
        %1019 = vmatprep.subr.mxu0 0.0
        %1020 = vmatpush2.xpose.msra.mxu0 %v983
        %1021 = vmatprep.subr.mxu0 0.0
        %1022 = vmatpush2.xpose.msra.mxu0 %v982
        %1023 = vmatprep.subr.mxu0 0.0
        %1024 = vmatpush2.xpose.msra.mxu0 %v981
        %1025 = vmatprep.subr.mxu0 0.0
        %1026 = vmatpush2.xpose.msra.mxu0 %v980
        %1027 = vmatprep.subr.mxu0 0.0
        %1028 = vmatpush2.xpose.msra.mxu0 %v979
        %1029 = vmatprep.subr.mxu0 0.0
        %1030 = vmatpush2.xpose.msra.mxu0 %v978
        %1031 = vmatprep.subr.mxu0 0.0
        %1032 = vmatpush2.xpose.msra.mxu0 %v977
        %1033 = vmatprep.subr.mxu0 0.0
        %1034 = vmatpush2.xpose.msra.mxu0 %v976
        %1035 = vmatprep.subr.mxu0 0.0
        %1036 = vmatpush2.xpose.msra.mxu0 %v975
        %1037 = vmatprep.subr.mxu0 0.0
        %1038 = vmatpush2.xpose.msra.mxu0 %v974
        %1039 = vmatprep.subr.mxu0 0.0
        %1040 = vmatpush2.xpose.msra.mxu0 %v973
        %1041 = vmatprep.subr.mxu0 0.0
        %1042 = vmatpush2.xpose.msra.mxu0 %v972
        %1043 = vmatprep.subr.mxu0 0.0
        %1044 = vmatpush2.xpose.msra.mxu0 %v971
        %1045 = vmatprep.subr.mxu0 0.0
        %1046 = vmatpush2.xpose.msra.mxu0 %v970
        %1047 = vmatprep.subr.mxu0 0.0
        %1048 = vmatpush2.xpose.msra.mxu0 %v969
        %1049 = vmatprep.mubr.f32.mxu0 0.0
        %1050 = vmatmul.mubr.f32.gmra.mxu0 %v201
        %v1051 = vpop.f32.mrf.mxu0
        %v1052 = vadd.f32 0.0, %v1051
        %v1053 = vpop.f32.mrf.mxu0
        %v1054 = vadd.f32 0.0, %v1053
        %1055 = vdwg.mxu0
        %vm1056 = vcmp.eq.s32.totalorder %v203, 7
        %v1057 = vsel %vm1056, %v1052, %v950
        %v1058 = vsel %vm1056, %v1054, %v951
        %v1059 = vmax.f32 %v1057, %v1058
        %1060 = vmax.xlane.f32.xlu0 %v1059
        %v1061 = vpop.xlane.xlu0 %1060
        %v1062 = vmax.f32 %v1061, -1e+30
        %v1063 = vsub.f32 %v1057, %v1062
        %v1064 = vsub.f32 %v1058, %v1062
        %v1065 = vmul.f32 %v1063, 1.442695
        %v1066 = vpow.pop %v1065
        %v1067 = vmul.f32 %v1064, 1.442695
        %v1068 = vpow.pop %v1067
        %v1069 = vadd.f32 %v1066, %v1068
        %1070 = vadd.xlane.f32.xlu0 %v1069
        %v1071 = vpop.xlane.xlu0 %1070
        %v1072 = vmax.f32 %v1071, 1e-30
        %v1073 = vrcp.pop %v1072
        %v1074 = vmul.f32 %v1066, %v1073
        %v1075 = vmul.f32 %v1068, %v1073
        %1076 = vst [vmem:[%s199] sm:$0xff] %v1074
        %1077 = vst [vmem:[%s199 + $0x8] sm:$0xff] %v1075
        %s1078 = sand.u32 %s82, 1
        %s1079 = scalar_lea.sflag [#allocation4], %s1078
        %s1080 = sand.u32 %s82, 1
        %s1081 = smul.addr %s1080, 16
        %s1082 = scalar_lea.vmem [#allocation7], %s1081
        // Predicated region
        $region37: #{attention_forward.1} parent=27 // pred_check
          %p1083 = pneg %p92
        $region38: #{attention_forward.1} parent=27 // pred_check_branch
          %1085 = sbr.rel (%p1083) target = $region40
        $region39: #{attention_forward.1} parent=27 // pred_region
          %s1087 = ssub.s32 256, 256
          %1088 = vsyncadd %s1079, %s1087
          %s1089 = smul.addr %s22, 2
          %s1090 = smul.addr %s1089, 128
          %s1091 = scalar_lea.hbm %s2, %s1090
          %s1093 = sshll.u32 %s1082, 4
          %s1094 = int_to_ptr.vmem [resolvable:$true] %s1093
          %1096 = dma.vmem_to_hbm [thread:$0]  %s1094, 256, %s1091, %s1079
        $region40: #{attention_forward.1} parent=27 // pred_fallthru
          _
      $region28: #{attention_forward.1} parent=5 // pred_fallthru
        _
      %p1097 = scmp.le.s32.totalorder 2, %s17
      // Predicated region
      $region41: #{attention_forward.1} parent=5 // pred_check
        %p1098 = pneg %p1097
      $region42: #{attention_forward.1} parent=5 // pred_check_branch
        %1100 = sbr.rel (%p1098) target = $region44
      $region43: #{attention_forward.1} parent=5 // pred_region
        %s1101 = ssub.s32 %s17, 2
        // Predicated region
        $region45: #{attention_forward.1} parent=43 // pred_check
          %p1102 = pneg %p98
        $region46: #{attention_forward.1} parent=43 // pred_check_branch
          %1104 = sbr.rel (%p1102) target = $region48
        $region47: #{attention_forward.1} parent=43 // pred_region
          %s1105 = sand.u32 %s83, 1
          %s1106 = scalar_lea.sflag [#allocation4], %s1105
          %s1107 = sand.u32 %s83, 1
          %s1108 = smul.addr %s1107, 16
          %s1109 = scalar_lea.vmem [#allocation7], %s1108
          %1110 = dma.done %s1106, 256
        $region48: #{attention_forward.1} parent=43 // pred_fallthru
          _
      $region44: #{attention_forward.1} parent=5 // pred_fallthru
        _
    $region6: #{attention_forward.1} parent=1 // loop_footer
      %s21 = sadd.s32 1, %s17
    $region7: #{attention_forward.1} parent=1 // loop_footer_branch
      %16 = sbr.rel target = $region3
    $region8: #{attention_forward.1} parent=1 // loop_exit
      _
    %1111 = vsyncpa [#allocation3], 1
    %s1112 = scalar_lea.sflag [#allocation3], 1
    %1113 = vsyncpa %s1112, 1
    %1114 = vsyncpa [#allocation6], 1
    %s1115 = scalar_lea.sflag [#allocation6], 1
    %1116 = vsyncpa %s1115, 1
    %1117 = vsyncpa [#allocation4], 1
    %s1118 = scalar_lea.sflag [#allocation4], 1
    %1119 = vsyncpa %s1118, 1

</llo_original>
